<compile_context>
chip_gen: v6e
topology: v6e:2x2x1
jax: 0.10.0
libtpu: 0.0.40
codegen_flags: <defaults>
</compile_context>

<pallas_src>
import jax
import jax.numpy as jnp
from jax import lax
from jax.experimental import pallas as pl
from jax.experimental.pallas import tpu as pltpu


_LANES = 128
_SUBLANES = 8


def _round_up(x, m):
    return (x + m - 1) // m * m


def _gelu(x):
    # tanh-approx GELU in f32 (EUP transcendental rides in its own bundle slot).
    # TODO(synk): on v6e/v7x with small Hp a bf16 GELU would relieve the VALU.
    c = 0.7978845608028654  # sqrt(2/pi)
    return 0.5 * x * (1.0 + jnp.tanh(c * (x + 0.044715 * x * x * x)))


# ---------------------------------------------------------------------------
# Generation-aware knobs
# ---------------------------------------------------------------------------
def _device_kind():
    try:
        return jax.devices()[0].device_kind.lower()
    except Exception:
        return ""


def _vmem_limit_bytes():
    """Scoped-VMEM budget: ~48 MiB on v7x (64 MiB physical), ~110 MiB on v5e/v6e."""
    try:
        cap = int(pltpu.get_tpu_info().vmem_capacity_bytes)
    except Exception:
        cap = 64 * 1024 * 1024  # conservative default (v7x-sized VMEM)
    return max(32 * 1024 * 1024, min(cap - 16 * 1024 * 1024, 110 * 1024 * 1024))


def _prefers_256_row_tiles():
    # v6e / v7x: 2x256^2 MXU -> 256-row tiles; v5e: 4x128^2 MXU -> 128-row tiles.
    kind = _device_kind()
    return ("v6" in kind) or ("v7" in kind)


def _pick_row_tile(rows, hp, vmem_limit):
    pref = 256 if _prefers_256_row_tiles() else 128
    # Keep the (2*tb, Hp) f32 gather scratch comfortably inside the VMEM budget.
    while pref > _SUBLANES and 2 * pref * hp * 4 > vmem_limit // 4:
        pref //= 2
    rows8 = _round_up(max(rows, 1), _SUBLANES)
    tb = min(pref, rows8)
    # Guarantee >= 2 grid steps when rows allow so dimension_semantics=("parallel",)
    # actually splits work across v7x's two TensorCores (no-op on v5e/v6e).
    if rows8 >= 2 * _SUBLANES and rows8 // tb < 2:
        tb = _round_up(rows8 // 2, _SUBLANES)
    return tb
    # Note: no bf16 activation blocks are loaded from HBM anymore, so the row
    # tile only needs to be a multiple of 8 (f32 output / scratch sublanes).


# ---------------------------------------------------------------------------
# Fused kernel: per-row embedding gather (+mean context) + MLP + selector head,
# fwd and rev combined, one (TB, 128) lane-dense output tile per grid step.
# ---------------------------------------------------------------------------
def _fused_mlm_kernel(ids_f_ref, pos_f_ref, ids_r_ref, pos_r_ref,   # SMEM (scalar prefetch)
                      emb_ref,                                      # (V, Hp) f32 in HBM
                      w1_ref, b1_ref, wf_ref, wr_ref, bsel_ref,     # resident VMEM weights
                      o_ref,                                        # (TB, 128) f32 out tile
                      x_scr, ebuf, sem):                            # scratch
    tb = o_ref.shape[0]
    hp = x_scr.shape[1]
    seq = ids_f_ref.shape[1]
    tile = pl.program_id(0)

    def gather_rows(ids_ref, pos_ref, base):
        # x[row] = emb[ids[row, pos[row]]] + mean_s emb[ids[row, s]]
        # S+1 row gathers from HBM per row, double-buffered through `ebuf`.
        @pl.loop(0, tb)
        def _(b):
            row = tile * tb + b
            p = pos_ref[row]

            def tok_id(j):
                jj = jnp.where(j < seq, j, p)      # j == seq -> prediction position
                return ids_ref[row, jj]

            # Prime slot 0 with the first token's embedding row.
            pltpu.make_async_copy(emb_ref.at[pl.ds(tok_id(0), 1), :],
                                  ebuf.at[0], sem.at[0]).start()

            def body(j, acc):
                slot = j % 2

                @pl.when(j + 1 <= seq)
                def _():
                    pltpu.make_async_copy(emb_ref.at[pl.ds(tok_id(j + 1), 1), :],
                                          ebuf.at[1 - slot], sem.at[1 - slot]).start()

                pltpu.make_async_copy(emb_ref.at[pl.ds(0, 1), :],
                                      ebuf.at[slot], sem.at[slot]).wait()
                w = jnp.where(j < seq, jnp.float32(1.0 / seq), jnp.float32(1.0))
                return acc + w * ebuf[slot]

            acc = lax.fori_loop(0, seq + 1, body, jnp.zeros((1, hp), jnp.float32))
            x_scr[pl.ds(base + b, 1), :] = acc

    gather_rows(ids_f_ref, pos_f_ref, 0)      # fwd rows -> x_scr[0:tb]
    gather_rows(ids_r_ref, pos_r_ref, tb)     # rev rows -> x_scr[tb:2*tb]

    # Fused MLM head on the stacked (fwd ++ rev) rows: one w1 matmul, then the
    # selector+0.5-folded fwd/rev head matmuls and the combine, all in-kernel.
    x2 = x_scr[...].astype(jnp.bfloat16)                                 # (2*tb, Hp)
    h = jnp.dot(x2, w1_ref[...], preferred_element_type=jnp.float32) + b1_ref[...]
    h = _gelu(h)                                                         # f32
    hf = h[:tb].astype(jnp.bfloat16)
    hr = h[tb:].astype(jnp.bfloat16)
    o_ref[...] = (jnp.dot(hf, wf_ref[...], preferred_element_type=jnp.float32)
                  + jnp.dot(hr, wr_ref[...], preferred_element_type=jnp.float32)
                  + bsel_ref[...])


# ---------------------------------------------------------------------------
# Host-side parameter preparation (done once) and the wrapper.
# ---------------------------------------------------------------------------
def init_params(key, vocab, hidden):
    k0, k1, k2, k3, k4 = jax.random.split(key, 5)
    emb = jax.random.normal(k0, (vocab, hidden), jnp.float32)
    w1 = jax.random.normal(k1, (hidden, hidden), jnp.float32) / jnp.sqrt(hidden)
    b1 = jax.random.normal(k3, (1, hidden), jnp.float32) * 0.1
    wo = jax.random.normal(k2, (hidden, vocab), jnp.float32) / jnp.sqrt(hidden)
    bo = jax.random.normal(k4, (1, vocab), jnp.float32) * 0.1
    return dict(emb=emb, w1=w1, b1=b1, wo=wo, bo=bo)


def prepare_kernel_params(params, id_a, id_c, id_g, id_t):
    """Fold selector columns + the 0.5 fwd/rev averaging into the weights, pad H."""
    H = params["w1"].shape[0]
    Hp = _round_up(H, _LANES)
    V = params["emb"].shape[0]

    emb = jnp.zeros((V, Hp), jnp.float32).at[:, :H].set(params["emb"])
    w1 = jnp.zeros((Hp, Hp), jnp.bfloat16).at[:H, :H].set(params["w1"].astype(jnp.bfloat16))
    b1 = jnp.zeros((1, Hp), jnp.float32).at[:, :H].set(params["b1"])

    sel_f = jnp.array([id_a, id_c, id_g, id_t], jnp.int32)
    sel_r = jnp.array([id_t, id_g, id_c, id_a], jnp.int32)
    # 0.5 scaling by a power of two commutes exactly with the bf16 cast.
    wf = jnp.zeros((Hp, _LANES), jnp.bfloat16).at[:H, :4].set(
        (0.5 * params["wo"][:, sel_f]).astype(jnp.bfloat16))
    wr = jnp.zeros((Hp, _LANES), jnp.bfloat16).at[:H, :4].set(
        (0.5 * params["wo"][:, sel_r]).astype(jnp.bfloat16))
    bsel = jnp.zeros((1, _LANES), jnp.float32).at[:, :4].set(
        0.5 * (params["bo"][:, sel_f] + params["bo"][:, sel_r]))

    return dict(emb=emb, w1=w1, b1=b1, wsel_fwd=wf, wsel_rev=wr, bsel=bsel)


def mlm_for_logits(kparams, input_ids_fwd, pos_fwd, input_ids_rev, pos_rev):
    B, S = input_ids_fwd.shape
    Hp = kparams["w1"].shape[0]

    vmem_limit = _vmem_limit_bytes()
    tb = _pick_row_tile(B, Hp, vmem_limit)
    rows_p = _round_up(B, tb)
    grid = (rows_p // tb,)

    # int32 ids/pos padded to the row-tile multiple (O(B*S) int32 only; pad id 0
    # is a valid emb row, padded output rows are garbage and sliced off below).
    def _pad_ids(ids):
        return jnp.zeros((rows_p, S), jnp.int32).at[:B].set(ids.astype(jnp.int32))

    def _pad_pos(pos):
        return jnp.zeros((rows_p,), jnp.int32).at[:B].set(pos.astype(jnp.int32))

    ids_f, ids_r = _pad_ids(input_ids_fwd), _pad_ids(input_ids_rev)
    pos_f, pos_r = _pad_pos(pos_fwd), _pad_pos(pos_rev)

    # Resident weights (constant index_map).  When the double-buffered footprint
    # would stress VMEM (large Hp, esp. on v7x's 64 MiB), request single buffering.
    w_bytes = Hp * Hp * 2 + 2 * Hp * _LANES * 2 + (Hp + _LANES) * 4
    single_buffer = 2 * w_bytes > vmem_limit // 2

    def _resident(shape):
        idx = lambda i, *_: (0, 0)
        if single_buffer:
            # TODO(synk): for Hp >= ~2048 a K-tiled "arbitrary" reduction axis with
            # an f32 VMEM accumulator would be preferable on v7x.
            return pl.BlockSpec(shape, idx, pipeline_mode=pl.Buffered(1))
        return pl.BlockSpec(shape, idx)

    n_rows = 2 * rows_p
    cost = pl.CostEstimate(
        flops=int(2 * n_rows * Hp * Hp + 2 * n_rows * Hp * _LANES
                  + n_rows * (S + 1) * Hp),
        transcendentals=int(n_rows * Hp),
        bytes_accessed=int(n_rows * (S + 1) * Hp * 4        # embedding row gathers
                           + n_rows * (S + 1) * 4           # ids / pos
                           + w_bytes                        # weights
                           + rows_p * _LANES * 4),          # output
    )

    out = pl.pallas_call(
        _fused_mlm_kernel,
        out_shape=jax.ShapeDtypeStruct((rows_p, _LANES), jnp.float32),
        grid_spec=pltpu.PrefetchScalarGridSpec(
            num_scalar_prefetch=4,                 # ids_fwd, pos_fwd, ids_rev, pos_rev -> SMEM
            grid=grid,
            in_specs=[
                pl.BlockSpec(memory_space=pl.ANY),   # emb stays in HBM (DMA-gathered)
                _resident((Hp, Hp)),                 # w1
                _resident((1, Hp)),                  # b1
                _resident((Hp, _LANES)),             # 0.5 * wo[:, [a,c,g,t]]
                _resident((Hp, _LANES)),             # 0.5 * wo[:, [t,g,c,a]]
                _resident((1, _LANES)),              # 0.5 * (bo[acgt] + bo[tgca])
            ],
            out_specs=pl.BlockSpec((tb, _LANES), lambda i, *_: (i, 0)),
            scratch_shapes=[
                pltpu.VMEM((2 * tb, Hp), jnp.float32),   # gathered fwd ++ rev rows
                pltpu.VMEM((2, 1, Hp), jnp.float32),     # double-buffered emb row
                pltpu.SemaphoreType.DMA((2,)),
            ],
        ),
        compiler_params=pltpu.CompilerParams(
            dimension_semantics=("parallel",),       # row tiles across TCs (v7x)
            vmem_limit_bytes=vmem_limit,             # generation-aware budget
        ),
        cost_estimate=cost,
    )(ids_f, pos_f, ids_r, pos_r,
      kparams["emb"], kparams["w1"], kparams["b1"],
      kparams["wsel_fwd"], kparams["wsel_rev"], kparams["bsel"])

    # Columns 0..3 hold the already-averaged [A, C, G, T] logits.
    return out[:B, :4]


def mlm_for_logits_reference(params, input_ids_fwd, pos_fwd, input_ids_rev, pos_rev,
                             id_a, id_c, id_g, id_t):
    """Pure-JAX reference mirroring the PyTorch forward semantics
    (same bf16-operand / f32-accumulate matmul numerics as the kernel)."""
    def get_logits(ids, pos):
        B = ids.shape[0]
        e = jnp.take(params["emb"], ids, axis=0)                 # (B, S, H)
        x = (e[jnp.arange(B), pos] + jnp.mean(e, axis=1)).astype(jnp.bfloat16)
        h = jnp.dot(x, params["w1"].astype(jnp.bfloat16),
                    preferred_element_type=jnp.float32) + params["b1"]
        h = _gelu(h).astype(jnp.bfloat16)
        return jnp.dot(h, params["wo"].astype(jnp.bfloat16),
                       preferred_element_type=jnp.float32) + params["bo"]
    lf = get_logits(input_ids_fwd, pos_fwd)[:, jnp.array([id_a, id_c, id_g, id_t])]
    lr = get_logits(input_ids_rev, pos_rev)[:, jnp.array([id_t, id_g, id_c, id_a])]
    return (lf + lr) / 2.0


if __name__ == "__main__":
    B, S, H, V = 4, 16, 64, 12
    id_a, id_c, id_g, id_t = 3, 4, 5, 6

    key = jax.random.PRNGKey(0)
    kp, ki1, kp1, ki2, kp2 = jax.random.split(key, 5)

    params = init_params(kp, V, H)
    kparams = prepare_kernel_params(params, id_a, id_c, id_g, id_t)

    input_ids_fwd = jax.random.randint(ki1, (B, S), 0, V, dtype=jnp.int32)
    pos_fwd = jax.random.randint(kp1, (B,), 0, S, dtype=jnp.int32)
    input_ids_rev = jax.random.randint(ki2, (B, S), 0, V, dtype=jnp.int32)
    pos_rev = jax.random.randint(kp2, (B,), 0, S, dtype=jnp.int32)

    run = jax.jit(mlm_for_logits)
    out = jax.block_until_ready(
        run(kparams, input_ids_fwd, pos_fwd, input_ids_rev, pos_rev))

    ref = jax.block_until_ready(
        mlm_for_logits_reference(params, input_ids_fwd, pos_fwd,
                                 input_ids_rev, pos_rev,
                                 id_a, id_c, id_g, id_t))

    assert out.shape == (B, 4) and out.dtype == jnp.float32
    # bf16 matmul operands + slightly different f32 accumulation order in the
    # fused gather -> compare at bf16-limited precision.
    assert jnp.allclose(out, ref, atol=5e-3, rtol=5e-3), (out, ref)
    print("KERNEL_OK")
</pallas_src>

<mosaic_0001>
module attributes {stable_mosaic.version = 11 : i64} {
  func.func @_fused_mlm_kernel(%arg0: i32, %arg1: memref<8x16xi32, #tpu.memory_space<smem>>, %arg2: memref<8xi32, #tpu.memory_space<smem>>, %arg3: memref<8x16xi32, #tpu.memory_space<smem>>, %arg4: memref<8xi32, #tpu.memory_space<smem>>, %arg5: memref<12x128xf32, #tpu.memory_space<any>>, %arg6: memref<128x128xbf16, #tpu.memory_space<vmem>>, %arg7: memref<1x128xf32, #tpu.memory_space<vmem>>, %arg8: memref<128x128xbf16, #tpu.memory_space<vmem>>, %arg9: memref<128x128xbf16, #tpu.memory_space<vmem>>, %arg10: memref<1x128xf32, #tpu.memory_space<vmem>>, %arg11: memref<8x128xf32, #tpu.memory_space<vmem>>, %arg12: memref<16x128xf32, #tpu.memory_space<vmem>>, %arg13: memref<2x1x128xf32, #tpu.memory_space<vmem>>, %arg14: memref<2x!tpu.dma_semaphore, #tpu.memory_space<semaphore_mem>>) attributes {dimension_semantics = [#tpu.dimension_semantics<parallel>], iteration_bounds = array<i64: 1>, scalar_prefetch = 4 : i64, scratch_operands = 3 : i64, tpu.core_type = #tpu.core_type<tc>, window_params = [{}, {pipeline_mode = #tpu.pipeline_mode<synchronous>, transform_indices = @transform_1, window_bounds = array<i64: 128, 128>}, {pipeline_mode = #tpu.pipeline_mode<synchronous>, transform_indices = @transform_2, window_bounds = array<i64: 1, 128>}, {pipeline_mode = #tpu.pipeline_mode<synchronous>, transform_indices = @transform_3, window_bounds = array<i64: 128, 128>}, {pipeline_mode = #tpu.pipeline_mode<synchronous>, transform_indices = @transform_4, window_bounds = array<i64: 128, 128>}, {pipeline_mode = #tpu.pipeline_mode<synchronous>, transform_indices = @transform_5, window_bounds = array<i64: 1, 128>}, {transform_indices = @transform_6, window_bounds = array<i64: 8, 128>}]} {
    %c0_i32 = arith.constant 0 : i32
    %c8_i32 = arith.constant 8 : i32
    %0 = arith.addi %c0_i32, %c8_i32 : i32
    %c1_i32 = arith.constant 1 : i32
    scf.for %arg15 = %c0_i32 to %0 step %c1_i32  : i32 {
      %c1_i32_24 = arith.constant 1 : i32
      %35 = arith.muli %arg15, %c1_i32_24 : i32
      %c0_i32_25 = arith.constant 0 : i32
      %36 = arith.addi %c0_i32_25, %35 : i32
      %c8_i32_26 = arith.constant 8 : i32
      %37 = arith.muli %arg0, %c8_i32_26 : i32
      %38 = arith.addi %37, %36 : i32
      %39 = arith.index_cast %38 : i32 to index
      %40 = memref.load %arg2[%39] : memref<8xi32, #tpu.memory_space<smem>>
      %true = arith.constant true
      %c0_i32_27 = arith.constant 0 : i32
      %41 = arith.select %true, %c0_i32_27, %40 : i32
      %42 = arith.index_cast %38 : i32 to index
      %43 = arith.index_cast %41 : i32 to index
      %44 = memref.load %arg1[%42, %43] : memref<8x16xi32, #tpu.memory_space<smem>>
      %c0_i32_28 = arith.constant 0 : i32
      %c0_i32_29 = arith.constant 0 : i32
      %c0_i32_30 = arith.constant 0 : i32
      %45 = tpu.memref_slice %arg5[%44, %c0_i32_30] : memref<12x128xf32, #tpu.memory_space<any>> -> memref<1x128xf32, #tpu.memory_space<any>>
      %c0_i32_31 = arith.constant 0 : i32
      %c0_i32_32 = arith.constant 0 : i32
      %46 = tpu.memref_slice %arg13[%c0_i32_28, %c0_i32_31, %c0_i32_32] : memref<2x1x128xf32, #tpu.memory_space<vmem>> -> memref<1x1x128xf32, #tpu.memory_space<vmem>>
      %47 = tpu.memref_squeeze %46 : memref<1x1x128xf32, #tpu.memory_space<vmem>> -> memref<1x128xf32, #tpu.memory_space<vmem>>
      %48 = tpu.memref_slice %arg14[%c0_i32_29] : memref<2x!tpu.dma_semaphore, #tpu.memory_space<semaphore_mem>> -> memref<1x!tpu.dma_semaphore, #tpu.memory_space<semaphore_mem>>
      %49 = tpu.memref_squeeze %48 : memref<1x!tpu.dma_semaphore, #tpu.memory_space<semaphore_mem>> -> memref<!tpu.dma_semaphore, #tpu.memory_space<semaphore_mem>>
      tpu.enqueue_dma source(%45 : memref<1x128xf32, #tpu.memory_space<any>>) target(%47 : memref<1x128xf32, #tpu.memory_space<vmem>>) target_semaphore(%49 : memref<!tpu.dma_semaphore, #tpu.memory_space<semaphore_mem>>)
      %cst_33 = arith.constant 0.000000e+00 : f32
      %50 = vector.broadcast %cst_33 : f32 to vector<1x128xf32>
      %c0_i32_34 = arith.constant 0 : i32
      %c17_i32 = arith.constant 17 : i32
      %51 = arith.addi %c0_i32_34, %c17_i32 : i32
      %c1_i32_35 = arith.constant 1 : i32
      %52 = scf.for %arg16 = %c0_i32_34 to %51 step %c1_i32_35 iter_args(%arg17 = %50) -> (vector<1x128xf32>)  : i32 {
        %c2_i32 = arith.constant 2 : i32
        %c0_i32_39 = arith.constant 0 : i32
        %56 = arith.cmpi eq, %c2_i32, %c0_i32_39 : i32
        %c1_i32_40 = arith.constant 1 : i32
        %57 = arith.select %56, %c1_i32_40, %c2_i32 : i32
        %58 = arith.remsi %arg16, %57 : i32
        %c0_i32_41 = arith.constant 0 : i32
        %59 = arith.cmpi ne, %58, %c0_i32_41 : i32
        %c0_i32_42 = arith.constant 0 : i32
        %60 = arith.cmpi slt, %58, %c0_i32_42 : i32
        %c0_i32_43 = arith.constant 0 : i32
        %61 = arith.cmpi slt, %57, %c0_i32_43 : i32
        %62 = arith.xori %60, %61 : i1
        %63 = arith.andi %62, %59 : i1
        %64 = arith.addi %58, %57 : i32
        %65 = arith.select %63, %64, %58 : i32
        %c1_i32_44 = arith.constant 1 : i32
        %66 = arith.addi %arg16, %c1_i32_44 : i32
        %c16_i32 = arith.constant 16 : i32
        %67 = arith.cmpi sle, %66, %c16_i32 : i32
        %68 = arith.extui %67 : i1 to i32
        %c0_i32_45 = arith.constant 0 : i32
        %69 = arith.cmpi ne, %68, %c0_i32_45 : i32
        scf.if %69 {
          %c1_i32_55 = arith.constant 1 : i32
          %83 = arith.addi %arg16, %c1_i32_55 : i32
          %c16_i32_56 = arith.constant 16 : i32
          %84 = arith.cmpi slt, %83, %c16_i32_56 : i32
          %85 = arith.select %84, %83, %40 : i32
          %86 = arith.index_cast %38 : i32 to index
          %87 = arith.index_cast %85 : i32 to index
          %88 = memref.load %arg1[%86, %87] : memref<8x16xi32, #tpu.memory_space<smem>>
          %c1_i32_57 = arith.constant 1 : i32
          %89 = arith.subi %c1_i32_57, %65 : i32
          %c1_i32_58 = arith.constant 1 : i32
          %90 = arith.subi %c1_i32_58, %65 : i32
          %c0_i32_59 = arith.constant 0 : i32
          %91 = tpu.memref_slice %arg5[%88, %c0_i32_59] : memref<12x128xf32, #tpu.memory_space<any>> -> memref<1x128xf32, #tpu.memory_space<any>>
          %c0_i32_60 = arith.constant 0 : i32
          %c0_i32_61 = arith.constant 0 : i32
          %92 = tpu.memref_slice %arg13[%89, %c0_i32_60, %c0_i32_61] : memref<2x1x128xf32, #tpu.memory_space<vmem>> -> memref<1x1x128xf32, #tpu.memory_space<vmem>>
          %93 = tpu.memref_squeeze %92 : memref<1x1x128xf32, #tpu.memory_space<vmem>> -> memref<1x128xf32, #tpu.memory_space<vmem>>
          %94 = tpu.memref_slice %arg14[%90] : memref<2x!tpu.dma_semaphore, #tpu.memory_space<semaphore_mem>> -> memref<1x!tpu.dma_semaphore, #tpu.memory_space<semaphore_mem>>
          %95 = tpu.memref_squeeze %94 : memref<1x!tpu.dma_semaphore, #tpu.memory_space<semaphore_mem>> -> memref<!tpu.dma_semaphore, #tpu.memory_space<semaphore_mem>>
          tpu.enqueue_dma source(%91 : memref<1x128xf32, #tpu.memory_space<any>>) target(%93 : memref<1x128xf32, #tpu.memory_space<vmem>>) target_semaphore(%95 : memref<!tpu.dma_semaphore, #tpu.memory_space<semaphore_mem>>)
        } else {
        }
        %c0_i32_46 = arith.constant 0 : i32
        %c0_i32_47 = arith.constant 0 : i32
        %70 = tpu.memref_slice %arg5[%c0_i32_46, %c0_i32_47] : memref<12x128xf32, #tpu.memory_space<any>> -> memref<1x128xf32, #tpu.memory_space<any>>
        %c0_i32_48 = arith.constant 0 : i32
        %c0_i32_49 = arith.constant 0 : i32
        %71 = tpu.memref_slice %arg13[%65, %c0_i32_48, %c0_i32_49] : memref<2x1x128xf32, #tpu.memory_space<vmem>> -> memref<1x1x128xf32, #tpu.memory_space<vmem>>
        %72 = tpu.memref_squeeze %71 : memref<1x1x128xf32, #tpu.memory_space<vmem>> -> memref<1x128xf32, #tpu.memory_space<vmem>>
        %73 = tpu.memref_slice %arg14[%65] : memref<2x!tpu.dma_semaphore, #tpu.memory_space<semaphore_mem>> -> memref<1x!tpu.dma_semaphore, #tpu.memory_space<semaphore_mem>>
        %74 = tpu.memref_squeeze %73 : memref<1x!tpu.dma_semaphore, #tpu.memory_space<semaphore_mem>> -> memref<!tpu.dma_semaphore, #tpu.memory_space<semaphore_mem>>
        tpu.wait_dma2 semaphore(%74 : memref<!tpu.dma_semaphore, #tpu.memory_space<semaphore_mem>>) src(%70 : memref<1x128xf32, #tpu.memory_space<any>>) dst(%72 : memref<1x128xf32, #tpu.memory_space<vmem>>)
        %c16_i32_50 = arith.constant 16 : i32
        %75 = arith.cmpi slt, %arg16, %c16_i32_50 : i32
        %cst_51 = arith.constant 6.250000e-02 : f32
        %cst_52 = arith.constant 1.000000e+00 : f32
        %76 = arith.select %75, %cst_51, %cst_52 : f32
        %77 = arith.index_cast %65 : i32 to index
        %c0_53 = arith.constant 0 : index
        %c0_54 = arith.constant 0 : index
        %78 = vector.load %arg13[%77, %c0_53, %c0_54] : memref<2x1x128xf32, #tpu.memory_space<vmem>>, vector<1x1x128xf32>
        %79 = vector.shape_cast %78 : vector<1x1x128xf32> to vector<1x128xf32>
        %80 = vector.broadcast %76 : f32 to vector<1x128xf32>
        %81 = arith.mulf %80, %79 : vector<1x128xf32>
        %82 = arith.addf %arg17, %81 : vector<1x128xf32>
        scf.yield %82 : vector<1x128xf32>
      }
      %c17_i32_36 = arith.constant 17 : i32
      %c0_i32_37 = arith.constant 0 : i32
      %53 = arith.addi %c0_i32_37, %36 : i32
      %54 = arith.index_cast %53 : i32 to index
      %c0_38 = arith.constant 0 : index
      %55 = vector.load %arg12[%54, %c0_38] : memref<16x128xf32, #tpu.memory_space<vmem>>, vector<1x128xf32>
      tpu.vector_store %arg12[%54, %c0_38], %52 {strides = array<i32>} : memref<16x128xf32, #tpu.memory_space<vmem>>, vector<1x128xf32>,
    }
    %c8_i32_0 = arith.constant 8 : i32
    %c0_i32_1 = arith.constant 0 : i32
    %c8_i32_2 = arith.constant 8 : i32
    %1 = arith.addi %c0_i32_1, %c8_i32_2 : i32
    %c1_i32_3 = arith.constant 1 : i32
    scf.for %arg15 = %c0_i32_1 to %1 step %c1_i32_3  : i32 {
      %c1_i32_24 = arith.constant 1 : i32
      %35 = arith.muli %arg15, %c1_i32_24 : i32
      %c0_i32_25 = arith.constant 0 : i32
      %36 = arith.addi %c0_i32_25, %35 : i32
      %c8_i32_26 = arith.constant 8 : i32
      %37 = arith.muli %arg0, %c8_i32_26 : i32
      %38 = arith.addi %37, %36 : i32
      %39 = arith.index_cast %38 : i32 to index
      %40 = memref.load %arg4[%39] : memref<8xi32, #tpu.memory_space<smem>>
      %true = arith.constant true
      %c0_i32_27 = arith.constant 0 : i32
      %41 = arith.select %true, %c0_i32_27, %40 : i32
      %42 = arith.index_cast %38 : i32 to index
      %43 = arith.index_cast %41 : i32 to index
      %44 = memref.load %arg3[%42, %43] : memref<8x16xi32, #tpu.memory_space<smem>>
      %c0_i32_28 = arith.constant 0 : i32
      %c0_i32_29 = arith.constant 0 : i32
      %c0_i32_30 = arith.constant 0 : i32
      %45 = tpu.memref_slice %arg5[%44, %c0_i32_30] : memref<12x128xf32, #tpu.memory_space<any>> -> memref<1x128xf32, #tpu.memory_space<any>>
      %c0_i32_31 = arith.constant 0 : i32
      %c0_i32_32 = arith.constant 0 : i32
      %46 = tpu.memref_slice %arg13[%c0_i32_28, %c0_i32_31, %c0_i32_32] : memref<2x1x128xf32, #tpu.memory_space<vmem>> -> memref<1x1x128xf32, #tpu.memory_space<vmem>>
      %47 = tpu.memref_squeeze %46 : memref<1x1x128xf32, #tpu.memory_space<vmem>> -> memref<1x128xf32, #tpu.memory_space<vmem>>
      %48 = tpu.memref_slice %arg14[%c0_i32_29] : memref<2x!tpu.dma_semaphore, #tpu.memory_space<semaphore_mem>> -> memref<1x!tpu.dma_semaphore, #tpu.memory_space<semaphore_mem>>
      %49 = tpu.memref_squeeze %48 : memref<1x!tpu.dma_semaphore, #tpu.memory_space<semaphore_mem>> -> memref<!tpu.dma_semaphore, #tpu.memory_space<semaphore_mem>>
      tpu.enqueue_dma source(%45 : memref<1x128xf32, #tpu.memory_space<any>>) target(%47 : memref<1x128xf32, #tpu.memory_space<vmem>>) target_semaphore(%49 : memref<!tpu.dma_semaphore, #tpu.memory_space<semaphore_mem>>)
      %cst_33 = arith.constant 0.000000e+00 : f32
      %50 = vector.broadcast %cst_33 : f32 to vector<1x128xf32>
      %c0_i32_34 = arith.constant 0 : i32
      %c17_i32 = arith.constant 17 : i32
      %51 = arith.addi %c0_i32_34, %c17_i32 : i32
      %c1_i32_35 = arith.constant 1 : i32
      %52 = scf.for %arg16 = %c0_i32_34 to %51 step %c1_i32_35 iter_args(%arg17 = %50) -> (vector<1x128xf32>)  : i32 {
        %c2_i32 = arith.constant 2 : i32
        %c0_i32_39 = arith.constant 0 : i32
        %56 = arith.cmpi eq, %c2_i32, %c0_i32_39 : i32
        %c1_i32_40 = arith.constant 1 : i32
        %57 = arith.select %56, %c1_i32_40, %c2_i32 : i32
        %58 = arith.remsi %arg16, %57 : i32
        %c0_i32_41 = arith.constant 0 : i32
        %59 = arith.cmpi ne, %58, %c0_i32_41 : i32
        %c0_i32_42 = arith.constant 0 : i32
        %60 = arith.cmpi slt, %58, %c0_i32_42 : i32
        %c0_i32_43 = arith.constant 0 : i32
        %61 = arith.cmpi slt, %57, %c0_i32_43 : i32
        %62 = arith.xori %60, %61 : i1
        %63 = arith.andi %62, %59 : i1
        %64 = arith.addi %58, %57 : i32
        %65 = arith.select %63, %64, %58 : i32
        %c1_i32_44 = arith.constant 1 : i32
        %66 = arith.addi %arg16, %c1_i32_44 : i32
        %c16_i32 = arith.constant 16 : i32
        %67 = arith.cmpi sle, %66, %c16_i32 : i32
        %68 = arith.extui %67 : i1 to i32
        %c0_i32_45 = arith.constant 0 : i32
        %69 = arith.cmpi ne, %68, %c0_i32_45 : i32
        scf.if %69 {
          %c1_i32_55 = arith.constant 1 : i32
          %83 = arith.addi %arg16, %c1_i32_55 : i32
          %c16_i32_56 = arith.constant 16 : i32
          %84 = arith.cmpi slt, %83, %c16_i32_56 : i32
          %85 = arith.select %84, %83, %40 : i32
          %86 = arith.index_cast %38 : i32 to index
          %87 = arith.index_cast %85 : i32 to index
          %88 = memref.load %arg3[%86, %87] : memref<8x16xi32, #tpu.memory_space<smem>>
          %c1_i32_57 = arith.constant 1 : i32
          %89 = arith.subi %c1_i32_57, %65 : i32
          %c1_i32_58 = arith.constant 1 : i32
          %90 = arith.subi %c1_i32_58, %65 : i32
          %c0_i32_59 = arith.constant 0 : i32
          %91 = tpu.memref_slice %arg5[%88, %c0_i32_59] : memref<12x128xf32, #tpu.memory_space<any>> -> memref<1x128xf32, #tpu.memory_space<any>>
          %c0_i32_60 = arith.constant 0 : i32
          %c0_i32_61 = arith.constant 0 : i32
          %92 = tpu.memref_slice %arg13[%89, %c0_i32_60, %c0_i32_61] : memref<2x1x128xf32, #tpu.memory_space<vmem>> -> memref<1x1x128xf32, #tpu.memory_space<vmem>>
          %93 = tpu.memref_squeeze %92 : memref<1x1x128xf32, #tpu.memory_space<vmem>> -> memref<1x128xf32, #tpu.memory_space<vmem>>
          %94 = tpu.memref_slice %arg14[%90] : memref<2x!tpu.dma_semaphore, #tpu.memory_space<semaphore_mem>> -> memref<1x!tpu.dma_semaphore, #tpu.memory_space<semaphore_mem>>
          %95 = tpu.memref_squeeze %94 : memref<1x!tpu.dma_semaphore, #tpu.memory_space<semaphore_mem>> -> memref<!tpu.dma_semaphore, #tpu.memory_space<semaphore_mem>>
          tpu.enqueue_dma source(%91 : memref<1x128xf32, #tpu.memory_space<any>>) target(%93 : memref<1x128xf32, #tpu.memory_space<vmem>>) target_semaphore(%95 : memref<!tpu.dma_semaphore, #tpu.memory_space<semaphore_mem>>)
        } else {
        }
        %c0_i32_46 = arith.constant 0 : i32
        %c0_i32_47 = arith.constant 0 : i32
        %70 = tpu.memref_slice %arg5[%c0_i32_46, %c0_i32_47] : memref<12x128xf32, #tpu.memory_space<any>> -> memref<1x128xf32, #tpu.memory_space<any>>
        %c0_i32_48 = arith.constant 0 : i32
        %c0_i32_49 = arith.constant 0 : i32
        %71 = tpu.memref_slice %arg13[%65, %c0_i32_48, %c0_i32_49] : memref<2x1x128xf32, #tpu.memory_space<vmem>> -> memref<1x1x128xf32, #tpu.memory_space<vmem>>
        %72 = tpu.memref_squeeze %71 : memref<1x1x128xf32, #tpu.memory_space<vmem>> -> memref<1x128xf32, #tpu.memory_space<vmem>>
        %73 = tpu.memref_slice %arg14[%65] : memref<2x!tpu.dma_semaphore, #tpu.memory_space<semaphore_mem>> -> memref<1x!tpu.dma_semaphore, #tpu.memory_space<semaphore_mem>>
        %74 = tpu.memref_squeeze %73 : memref<1x!tpu.dma_semaphore, #tpu.memory_space<semaphore_mem>> -> memref<!tpu.dma_semaphore, #tpu.memory_space<semaphore_mem>>
        tpu.wait_dma2 semaphore(%74 : memref<!tpu.dma_semaphore, #tpu.memory_space<semaphore_mem>>) src(%70 : memref<1x128xf32, #tpu.memory_space<any>>) dst(%72 : memref<1x128xf32, #tpu.memory_space<vmem>>)
        %c16_i32_50 = arith.constant 16 : i32
        %75 = arith.cmpi slt, %arg16, %c16_i32_50 : i32
        %cst_51 = arith.constant 6.250000e-02 : f32
        %cst_52 = arith.constant 1.000000e+00 : f32
        %76 = arith.select %75, %cst_51, %cst_52 : f32
        %77 = arith.index_cast %65 : i32 to index
        %c0_53 = arith.constant 0 : index
        %c0_54 = arith.constant 0 : index
        %78 = vector.load %arg13[%77, %c0_53, %c0_54] : memref<2x1x128xf32, #tpu.memory_space<vmem>>, vector<1x1x128xf32>
        %79 = vector.shape_cast %78 : vector<1x1x128xf32> to vector<1x128xf32>
        %80 = vector.broadcast %76 : f32 to vector<1x128xf32>
        %81 = arith.mulf %80, %79 : vector<1x128xf32>
        %82 = arith.addf %arg17, %81 : vector<1x128xf32>
        scf.yield %82 : vector<1x128xf32>
      }
      %c17_i32_36 = arith.constant 17 : i32
      %c8_i32_37 = arith.constant 8 : i32
      %53 = arith.addi %c8_i32_37, %36 : i32
      %54 = arith.index_cast %53 : i32 to index
      %c0_38 = arith.constant 0 : index
      %55 = vector.load %arg12[%54, %c0_38] : memref<16x128xf32, #tpu.memory_space<vmem>>, vector<1x128xf32>
      tpu.vector_store %arg12[%54, %c0_38], %52 {strides = array<i32>} : memref<16x128xf32, #tpu.memory_space<vmem>>, vector<1x128xf32>,
    }
    %c8_i32_4 = arith.constant 8 : i32
    %c0 = arith.constant 0 : index
    %c0_5 = arith.constant 0 : index
    %2 = vector.load %arg12[%c0, %c0_5] : memref<16x128xf32, #tpu.memory_space<vmem>>, vector<16x128xf32>
    %3 = arith.truncf %2 : vector<16x128xf32> to vector<16x128xbf16>
    %c0_6 = arith.constant 0 : index
    %c0_7 = arith.constant 0 : index
    %4 = vector.load %arg6[%c0_6, %c0_7] : memref<128x128xbf16, #tpu.memory_space<vmem>>, vector<128x128xbf16>
    %cst = arith.constant dense<0.000000e+00> : vector<16x128xf32>
    %5 = tpu.matmul %3, %4, %cst {dimension_numbers = #tpu.dot_dimension_numbers<[1], [0], [0], [1], [0, 0, 1, 1], [], []>} : vector<16x128xbf16>, vector<128x128xbf16>, vector<16x128xf32> -> vector<16x128xf32>
    %c0_8 = arith.constant 0 : index
    %c0_9 = arith.constant 0 : index
    %6 = vector.load %arg7[%c0_8, %c0_9] : memref<1x128xf32, #tpu.memory_space<vmem>>, vector<1x128xf32>
    %7 = vector.broadcast %6 : vector<1x128xf32> to vector<16x128xf32>
    %8 = arith.addf %5, %7 : vector<16x128xf32>
    %cst_10 = arith.constant 5.000000e-01 : f32
    %9 = vector.broadcast %cst_10 : f32 to vector<16x128xf32>
    %10 = arith.mulf %9, %8 : vector<16x128xf32>
    %cst_11 = arith.constant 4.471500e-02 : f32
    %11 = vector.broadcast %cst_11 : f32 to vector<16x128xf32>
    %12 = arith.mulf %11, %8 : vector<16x128xf32>
    %13 = arith.mulf %12, %8 : vector<16x128xf32>
    %14 = arith.mulf %13, %8 : vector<16x128xf32>
    %15 = arith.addf %8, %14 : vector<16x128xf32>
    %cst_12 = arith.constant 0.797884583 : f32
    %16 = vector.broadcast %cst_12 : f32 to vector<16x128xf32>
    %17 = arith.mulf %16, %15 : vector<16x128xf32>
    %18 = math.tanh %17 : vector<16x128xf32>
    %cst_13 = arith.constant 1.000000e+00 : f32
    %19 = vector.broadcast %cst_13 : f32 to vector<16x128xf32>
    %20 = arith.addf %19, %18 : vector<16x128xf32>
    %21 = arith.mulf %10, %20 : vector<16x128xf32>
    %22 = vector.extract_strided_slice %21 {offsets = [0, 0], sizes = [8, 128], strides = [1, 1]} : vector<16x128xf32> to vector<8x128xf32>
    %23 = arith.truncf %22 : vector<8x128xf32> to vector<8x128xbf16>
    %24 = vector.extract_strided_slice %21 {offsets = [8, 0], sizes = [8, 128], strides = [1, 1]} : vector<16x128xf32> to vector<8x128xf32>
    %25 = arith.truncf %24 : vector<8x128xf32> to vector<8x128xbf16>
    %c0_14 = arith.constant 0 : index
    %c0_15 = arith.constant 0 : index
    %26 = vector.load %arg8[%c0_14, %c0_15] : memref<128x128xbf16, #tpu.memory_space<vmem>>, vector<128x128xbf16>
    %cst_16 = arith.constant dense<0.000000e+00> : vector<8x128xf32>
    %27 = tpu.matmul %23, %26, %cst_16 {dimension_numbers = #tpu.dot_dimension_numbers<[1], [0], [0], [1], [0, 0, 1, 1], [], []>} : vector<8x128xbf16>, vector<128x128xbf16>, vector<8x128xf32> -> vector<8x128xf32>
    %c0_17 = arith.constant 0 : index
    %c0_18 = arith.constant 0 : index
    %28 = vector.load %arg9[%c0_17, %c0_18] : memref<128x128xbf16, #tpu.memory_space<vmem>>, vector<128x128xbf16>
    %cst_19 = arith.constant dense<0.000000e+00> : vector<8x128xf32>
    %29 = tpu.matmul %25, %28, %cst_19 {dimension_numbers = #tpu.dot_dimension_numbers<[1], [0], [0], [1], [0, 0, 1, 1], [], []>} : vector<8x128xbf16>, vector<128x128xbf16>, vector<8x128xf32> -> vector<8x128xf32>
    %30 = arith.addf %27, %29 : vector<8x128xf32>
    %c0_20 = arith.constant 0 : index
    %c0_21 = arith.constant 0 : index
    %31 = vector.load %arg10[%c0_20, %c0_21] : memref<1x128xf32, #tpu.memory_space<vmem>>, vector<1x128xf32>
    %32 = vector.broadcast %31 : vector<1x128xf32> to vector<8x128xf32>
    %33 = arith.addf %30, %32 : vector<8x128xf32>
    %c0_22 = arith.constant 0 : index
    %c0_23 = arith.constant 0 : index
    %34 = vector.load %arg11[%c0_22, %c0_23] : memref<8x128xf32, #tpu.memory_space<vmem>>, vector<8x128xf32>
    tpu.vector_store %arg11[%c0_22, %c0_23], %33 {strides = array<i32>} : memref<8x128xf32, #tpu.memory_space<vmem>>, vector<8x128xf32>,
    return
  }
  func.func @transform_1(%arg0: i32, %arg1: memref<8x16xi32, #tpu.memory_space<smem>>, %arg2: memref<8xi32, #tpu.memory_space<smem>>, %arg3: memref<8x16xi32, #tpu.memory_space<smem>>, %arg4: memref<8xi32, #tpu.memory_space<smem>>) -> (i32, i32) {
    %c0_i32 = arith.constant 0 : i32
    %c0_i32_0 = arith.constant 0 : i32
    %c0_i32_1 = arith.constant 0 : i32
    return %c0_i32, %c0_i32_0 : i32, i32
  }
  func.func @transform_2(%arg0: i32, %arg1: memref<8x16xi32, #tpu.memory_space<smem>>, %arg2: memref<8xi32, #tpu.memory_space<smem>>, %arg3: memref<8x16xi32, #tpu.memory_space<smem>>, %arg4: memref<8xi32, #tpu.memory_space<smem>>) -> (i32, i32) {
    %c0_i32 = arith.constant 0 : i32
    %c0_i32_0 = arith.constant 0 : i32
    %c0_i32_1 = arith.constant 0 : i32
    return %c0_i32, %c0_i32_0 : i32, i32
  }
  func.func @transform_3(%arg0: i32, %arg1: memref<8x16xi32, #tpu.memory_space<smem>>, %arg2: memref<8xi32, #tpu.memory_space<smem>>, %arg3: memref<8x16xi32, #tpu.memory_space<smem>>, %arg4: memref<8xi32, #tpu.memory_space<smem>>) -> (i32, i32) {
    %c0_i32 = arith.constant 0 : i32
    %c0_i32_0 = arith.constant 0 : i32
    %c0_i32_1 = arith.constant 0 : i32
    return %c0_i32, %c0_i32_0 : i32, i32
  }
  func.func @transform_4(%arg0: i32, %arg1: memref<8x16xi32, #tpu.memory_space<smem>>, %arg2: memref<8xi32, #tpu.memory_space<smem>>, %arg3: memref<8x16xi32, #tpu.memory_space<smem>>, %arg4: memref<8xi32, #tpu.memory_space<smem>>) -> (i32, i32) {
    %c0_i32 = arith.constant 0 : i32
    %c0_i32_0 = arith.constant 0 : i32
    %c0_i32_1 = arith.constant 0 : i32
    return %c0_i32, %c0_i32_0 : i32, i32
  }
  func.func @transform_5(%arg0: i32, %arg1: memref<8x16xi32, #tpu.memory_space<smem>>, %arg2: memref<8xi32, #tpu.memory_space<smem>>, %arg3: memref<8x16xi32, #tpu.memory_space<smem>>, %arg4: memref<8xi32, #tpu.memory_space<smem>>) -> (i32, i32) {
    %c0_i32 = arith.constant 0 : i32
    %c0_i32_0 = arith.constant 0 : i32
    %c0_i32_1 = arith.constant 0 : i32
    return %c0_i32, %c0_i32_0 : i32, i32
  }
  func.func @transform_6(%arg0: i32, %arg1: memref<8x16xi32, #tpu.memory_space<smem>>, %arg2: memref<8xi32, #tpu.memory_space<smem>>, %arg3: memref<8x16xi32, #tpu.memory_space<smem>>, %arg4: memref<8xi32, #tpu.memory_space<smem>>) -> (i32, i32) {
    %c0_i32 = arith.constant 0 : i32
    %c0_i32_0 = arith.constant 0 : i32
    return %arg0, %c0_i32 : i32, i32
  }
}

</mosaic_0001>

<llo_original>
// kernel: mlm_for_logits.1
$region0: #{mlm_for_logits.1}
  #allocation0 [shape = 'u32[]', space=smem, size = 0x4, offset = 0x4, fixed_abs, tag = 'smem constant byte address 0x4 - core index']
  #allocation1 [shape = 'u32[144,128]{1,0:T(1,128)}', space=vmem, size = 0x12000, scoped, tag = 'internal scratch']
  #allocation2 [shape = 'f32[16,128]{1,0:T(8,128)}', space=vmem, size = 0x2000, scoped, tag = 'scratch operand']
  #allocation3 [shape = 'f32[2,1,128]{2,1,0:T(1,128)}', space=vmem, size = 0x400, scoped, tag = 'scratch operand']
  #allocation4 [shape = 's32[2]{0}', space=sflag, size = 0x8, scoped, tag = 'scratch operand']
  #allocation5 [shape = 's32[1]{0}', space=sflag, size = 0x4, scoped, tag = 'scoped memory for mlm_for_logits.1']
  #allocation6 [shape = 'u8[4096]{0}', space=smem, size = 0x1000, scoped, tag = 'prefetched SMEM operand 0']
  #allocation7 [shape = 'u8[512]{0}', space=smem, size = 0x200, scoped, tag = 'prefetched SMEM operand 1']
  #allocation8 [shape = 'u8[4096]{0}', space=smem, size = 0x1000, scoped, tag = 'prefetched SMEM operand 2']
  #allocation9 [shape = 'u8[512]{0}', space=smem, size = 0x200, scoped, tag = 'prefetched SMEM operand 3']
  #allocation15 [shape = 's32[]', space=sflag, size = 0x4, offset = 0, fixed_abs, tag = 'sflag constant byte address 0x0 - dummy sync flag']
  #allocation16 [shape = 's32[]', space=sflag, size = 0x4, offset = 0, fixed_abs, tag = 'sflag constant byte address 0x0 - dummy sync flag']
  #allocation17 [shape = 's32[]', space=sflag, size = 0x4, offset = 0, fixed_abs, tag = 'sflag constant byte address 0x0 - dummy sync flag']
  #allocation18 [shape = 's32[]', space=sflag, size = 0x4, offset = 0, fixed_abs, tag = 'sflag constant byte address 0x0 - dummy sync flag']
  %s0 = inlined_call_operand.vmem [shape: s32[8,16], index: 0, kind: input, shape index: {}]
  %s1 = inlined_call_operand.vmem [shape: s32[8], index: 1, kind: input, shape index: {}]
  %s2 = inlined_call_operand.vmem [shape: s32[8,16], index: 2, kind: input, shape index: {}]
  %s3 = inlined_call_operand.vmem [shape: s32[8], index: 3, kind: input, shape index: {}]
  %s4 = inlined_call_operand.vmem [shape: f32[12,128], index: 4, kind: input, shape index: {}]
  %s5 = inlined_call_operand.hbm [shape: bf16[128,128], index: 5, kind: input, shape index: {}]
  %s6 = inlined_call_operand.vmem [shape: f32[1,128], index: 6, kind: input, shape index: {}]
  %s7 = inlined_call_operand.hbm [shape: bf16[128,128], index: 7, kind: input, shape index: {}]
  %s8 = inlined_call_operand.hbm [shape: bf16[128,128], index: 8, kind: input, shape index: {}]
  %s9 = inlined_call_operand.vmem [shape: f32[1,128], index: 9, kind: input, shape index: {}]
  %s10 = inlined_call_operand.vmem [shape: f32[8,128], index: 10, kind: output, shape index: {}]
  %s11 = sld [smem:[#allocation0]]
  $region198: #{mlm_for_logits.1} parent=0
    _
  %s13 = ssub.s32 1, %s11
  %s14 = scalar_select 0, %s13, %s11
  %s15 = sshll.u32 %s0, 4
  %s16 = int_to_ptr.vmem [resolvable:$true] %s15
  %18 = dma.vmem_to_smem %s16, 128, [#allocation6], [#allocation5]
  %s19 = sshll.u32 %s1, 4
  %s20 = int_to_ptr.vmem [resolvable:$true] %s19
  %22 = dma.vmem_to_smem %s20, 16, [#allocation7], [#allocation5]
  %s23 = sshll.u32 %s2, 4
  %s24 = int_to_ptr.vmem [resolvable:$true] %s23
  %26 = dma.vmem_to_smem %s24, 128, [#allocation8], [#allocation5]
  %s27 = sshll.u32 %s3, 4
  %s28 = int_to_ptr.vmem [resolvable:$true] %s27
  %30 = dma.vmem_to_smem %s28, 16, [#allocation9], [#allocation5]
  %31 = dma.done [#allocation5], 288
  %32 = sfence
  $region1: #{mlm_for_logits.1} parent=0
    #allocation10 [shape = 'u8[32768]{0}', space=vmem, size = 0x8000, scoped, tag = 'input window, operand 5, single buffered']
    #allocation11 [shape = 's32[1]{0}', space=sflag, size = 0x4, scoped, tag = 'scoped memory for mlm_for_logits.1']
    #allocation12 [shape = 'u8[32768]{0}', space=vmem, size = 0x8000, scoped, tag = 'input window, operand 7, single buffered']
    #allocation13 [shape = 's32[1]{0}', space=sflag, size = 0x4, scoped, tag = 'scoped memory for mlm_for_logits.1']
    #allocation14 [shape = 'u8[32768]{0}', space=vmem, size = 0x8000, scoped, tag = 'input window, operand 8, single buffered']
    %33 = vsyncpa [#allocation11], 0
    %34 = vsyncpa [#allocation13], 0
    // Predicated region
    $region2: #{mlm_for_logits.1} parent=1 // pred_check
      _
    $region3: #{mlm_for_logits.1} parent=1 // pred_check_branch
      %36 = sbr.rel (0) target = $region5
    $region4: #{mlm_for_logits.1} parent=1 // pred_region
      %s38 = ssub.s32 1024, 1024
      %39 = vsyncadd [#allocation11], %s38
      %s40 = sshll.u32 [#allocation10], 4
      %s41 = int_to_ptr.vmem [resolvable:$true] %s40
      %46 = dma.hbm_to_vmem [thread:$0]  %s5, 1024, %s41, [#allocation11], 64, 64, 4
    $region5: #{mlm_for_logits.1} parent=1 // pred_fallthru
      _
    // Predicated region
    $region6: #{mlm_for_logits.1} parent=1 // pred_check
      _
    $region7: #{mlm_for_logits.1} parent=1 // pred_check_branch
      %48 = sbr.rel (0) target = $region9
    $region8: #{mlm_for_logits.1} parent=1 // pred_region
      _
    $region9: #{mlm_for_logits.1} parent=1 // pred_fallthru
      _
    // Predicated region
    $region10: #{mlm_for_logits.1} parent=1 // pred_check
      _
    $region11: #{mlm_for_logits.1} parent=1 // pred_check_branch
      %50 = sbr.rel (0) target = $region13
    $region12: #{mlm_for_logits.1} parent=1 // pred_region
      %s52 = ssub.s32 1024, 1024
      %53 = vsyncadd [#allocation13], %s52
      %s54 = sshll.u32 [#allocation12], 4
      %s55 = int_to_ptr.vmem [resolvable:$true] %s54
      %60 = dma.hbm_to_vmem [thread:$0]  %s7, 1024, %s55, [#allocation13], 64, 64, 4
    $region13: #{mlm_for_logits.1} parent=1 // pred_fallthru
      _
    // Predicated region
    $region14: #{mlm_for_logits.1} parent=1 // pred_check
      _
    $region15: #{mlm_for_logits.1} parent=1 // pred_check_branch
      %62 = sbr.rel (0) target = $region17
    $region16: #{mlm_for_logits.1} parent=1 // pred_region
      %s64 = ssub.s32 1024, 1024
      %65 = vsyncadd [#allocation13], %s64
      %s66 = sshll.u32 [#allocation14], 4
      %s67 = int_to_ptr.vmem [resolvable:$true] %s66
      %72 = dma.hbm_to_vmem [thread:$0]  %s8, 1024, %s67, [#allocation13], 64, 64, 4
    $region17: #{mlm_for_logits.1} parent=1 // pred_fallthru
      _
    // Predicated region
    $region18: #{mlm_for_logits.1} parent=1 // pred_check
      _
    $region19: #{mlm_for_logits.1} parent=1 // pred_check_branch
      %74 = sbr.rel (0) target = $region21
    $region20: #{mlm_for_logits.1} parent=1 // pred_region
      _
    $region21: #{mlm_for_logits.1} parent=1 // pred_fallthru
      _
    // Predicated region
    $region22: #{mlm_for_logits.1} parent=1 // pred_check
      _
    $region23: #{mlm_for_logits.1} parent=1 // pred_check_branch
      %76 = sbr.rel (0) target = $region25
    $region24: #{mlm_for_logits.1} parent=1 // pred_region
      %77 = dma.done [#allocation11], 1024
    $region25: #{mlm_for_logits.1} parent=1 // pred_fallthru
      _
    // Predicated region
    $region26: #{mlm_for_logits.1} parent=1 // pred_check
      _
    $region27: #{mlm_for_logits.1} parent=1 // pred_check_branch
      %79 = sbr.rel (0) target = $region29
    $region28: #{mlm_for_logits.1} parent=1 // pred_region
      %80 = dma.done [#allocation13], 1024
    $region29: #{mlm_for_logits.1} parent=1 // pred_fallthru
      _
    // Predicated region
    $region30: #{mlm_for_logits.1} parent=1 // pred_check
      _
    $region31: #{mlm_for_logits.1} parent=1 // pred_check_branch
      %82 = sbr.rel (0) target = $region33
    $region32: #{mlm_for_logits.1} parent=1 // pred_region
      %83 = dma.done [#allocation13], 1024
    $region33: #{mlm_for_logits.1} parent=1 // pred_fallthru
      _
    loop: start=0, step=1, limit=8
    $region34: #{mlm_for_logits.1} parent=1 // loop_pre_header
      _
    $region35: #{mlm_for_logits.1} parent=1 // loop_header
      %s86 = sphi 0, %s90
      %p87 = scmp.ge.s32.totalorder %s86, 8
    $region36: #{mlm_for_logits.1} parent=1 // loop_header_branch
      %89 = sbr.rel (%p87) target = $region40
    $region37: #{mlm_for_logits.1} parent=1 // loop_body
      %s91 = smul.u32 0, 8
      %s92 = sadd.s32 %s91, %s86
      %s93 = sld [smem:[#allocation7 + %s92]]
      %s94 = smul.u32 %s92, 128
      %s95 = sld [smem:[#allocation6 + %s94]]
      %s96 = scalar_lea.vmem %s4, %s95
      %p98 = scmp.lt.u32.totalorder 1, 8
      %p99 = pneg %p98
      // Predicated region
      $region41: #{mlm_for_logits.1} parent=37 // pred_check
        _
      $region42: #{mlm_for_logits.1} parent=37 // pred_check_branch
        %101 = sbr.rel (%p98) target = $region44
      $region43: #{mlm_for_logits.1} parent=37 // pred_region
        %s117 = sand.u32 1, 7
        %p118 = scmp.eq.s32.totalorder %s117, 0
        %p119 = pneg %p118
        // Predicated region
        $region56: #{mlm_for_logits.1} parent=43 // pred_check
          _
        $region57: #{mlm_for_logits.1} parent=43 // pred_check_branch
          %121 = sbr.rel (%p118) target = $region59
        $region58: #{mlm_for_logits.1} parent=43 // pred_region
          %s122 = sand.u32 1, 7
          %s123 = ssub.s32 1, %s122
          %s124 = scalar_lea.vmem %s96, %s123
          %s125 = ssub.s32 1, %s122
          %s126 = scalar_lea.vmem [#allocation3], %s125
          %s127 = sshll.u32 1, %s122
          %s128 = ssub.s32 %s127, 1
          loop: start=0, step=1, limit=1
          $region60: #{mlm_for_logits.1} parent=58 // loop_pre_header
            _
          $region61: #{mlm_for_logits.1} parent=58 // loop_header
            %s130 = sphi 0, %s134
            %p131 = scmp.ge.s32.totalorder %s130, 1
            %s135 = sphi %s124, %s124
            %s136 = sphi %s126, %s126
          $region62: #{mlm_for_logits.1} parent=58 // loop_header_branch
            %133 = sbr.rel (%p131) target = $region66
          $region63: #{mlm_for_logits.1} parent=58 // loop_body
            %v137 = vld [vmem:[%s135] sm:%s128]
            %138 = vst [vmem:[%s136] sm:%s128] %v137
          $region64: #{mlm_for_logits.1} parent=58 // loop_footer
            %s134 = sadd.s32 1, %s130
          $region65: #{mlm_for_logits.1} parent=58 // loop_footer_branch
            %129 = sbr.rel target = $region61
          $region66: #{mlm_for_logits.1} parent=58 // loop_exit
            _
        $region59: #{mlm_for_logits.1} parent=43 // pred_fallthru
          _
      $region44: #{mlm_for_logits.1} parent=37 // pred_fallthru
        _
      // Predicated region
      $region45: #{mlm_for_logits.1} parent=37 // pred_check
        %p102 = pneg %p98
      $region46: #{mlm_for_logits.1} parent=37 // pred_check_branch
        %104 = sbr.rel (%p102) target = $region48
      $region47: #{mlm_for_logits.1} parent=37 // pred_region
        %s105 = sshll.u32 1, 1
        %s106 = ssub.s32 %s105, 1
        loop: start=0, step=1, limit=1
        $region49: #{mlm_for_logits.1} parent=47 // loop_pre_header
          _
        $region50: #{mlm_for_logits.1} parent=47 // loop_header
          %s108 = sphi 0, %s112
          %p109 = scmp.ge.s32.totalorder %s108, 1
          %s113 = sphi %s96, %s96
          %s114 = sphi [#allocation3], [#allocation3]
        $region51: #{mlm_for_logits.1} parent=47 // loop_header_branch
          %111 = sbr.rel (%p109) target = $region55
        $region52: #{mlm_for_logits.1} parent=47 // loop_body
          %v115 = vld [vmem:[%s113] sm:%s106]
          %116 = vst [vmem:[%s114] sm:%s106] %v115
        $region53: #{mlm_for_logits.1} parent=47 // loop_footer
          %s112 = sadd.s32 1, %s108
        $region54: #{mlm_for_logits.1} parent=47 // loop_footer_branch
          %107 = sbr.rel target = $region50
        $region55: #{mlm_for_logits.1} parent=47 // loop_exit
          _
      $region48: #{mlm_for_logits.1} parent=37 // pred_fallthru
        _
      // Predicated region
      $region67: #{mlm_for_logits.1} parent=37 // pred_check
        _
      $region68: #{mlm_for_logits.1} parent=37 // pred_check_branch
        %141 = sbr.rel (0) target = $region70
      $region69: #{mlm_for_logits.1} parent=37 // pred_region
        %142 = vsyncadd [#allocation4], 16
      $region70: #{mlm_for_logits.1} parent=37 // pred_fallthru
        _
      loop: start=0, step=1, limit=17
      $region71: #{mlm_for_logits.1} parent=37 // loop_pre_header
        _
      $region72: #{mlm_for_logits.1} parent=37 // loop_header
        %s144 = sphi 0, %s148
        %p145 = scmp.ge.s32.totalorder %s144, 17
        %v149 = vphi 0.0, %v237
      $region73: #{mlm_for_logits.1} parent=37 // loop_header_branch
        %147 = sbr.rel (%p145) target = $region77
      $region74: #{mlm_for_logits.1} parent=37 // loop_body
        %p150 = scmp.lt.s32.totalorder %s144, 0
        %s151 = ssub.s32 0, %s144
        %s152 = scalar_select %p150, %s151, %s144
        %s153 = sand.u32 %s152, 1
        %s154 = ssub.s32 0, %s153
        %s155 = scalar_select %p150, %s154, %s153
        %p156 = scmp.ne.s32.totalorder %s155, 0
        %p157 = scmp.lt.s32.totalorder %s155, 0
        %p158 = pnand %p157, %p156
        %p159 = pneg %p158
        %s160 = sadd.s32 %s155, 2
        %s161 = scalar_select %p159, %s160, %s155
        %s162 = sadd.s32 %s144, 1
        %p163 = scmp.le.s32.totalorder %s162, 16
        // Predicated region
        $region78: #{mlm_for_logits.1} parent=74 // pred_check
          %p164 = pneg %p163
        $region79: #{mlm_for_logits.1} parent=74 // pred_check_branch
          %166 = sbr.rel (%p164) target = $region81
        $region80: #{mlm_for_logits.1} parent=74 // pred_region
          %p167 = scmp.lt.s32.totalorder %s162, 16
          %s168 = scalar_select %p167, %s162, %s93
          %s169 = sshra.s32 %s168, 7
          %s170 = sand.u32 %s168, 127
          %s171 = sadd.s32 %s169, %s92
          %s172 = smul.u32 %s171, 128
          %s173 = sshra.s32 %s168, 7
          %s174 = sand.u32 %s168, 127
          %s175 = sadd.s32 %s172, %s174
          %s176 = sld [smem:[#allocation6 + %s175]]
          %s177 = ssub.s32 1, %s161
          %s178 = scalar_lea.vmem %s4, %s176
          %s179 = scalar_lea.vmem [#allocation3], %s177
          %s180 = scalar_lea.sflag [#allocation4], %s177
          %p182 = scmp.lt.u32.totalorder 1, 8
          %p183 = pneg %p182
          // Predicated region
          $region82: #{mlm_for_logits.1} parent=80 // pred_check
            _
          $region83: #{mlm_for_logits.1} parent=80 // pred_check_branch
            %185 = sbr.rel (%p182) target = $region85
          $region84: #{mlm_for_logits.1} parent=80 // pred_region
            %s201 = sand.u32 1, 7
            %p202 = scmp.eq.s32.totalorder %s201, 0
            %p203 = pneg %p202
            // Predicated region
            $region97: #{mlm_for_logits.1} parent=84 // pred_check
              _
            $region98: #{mlm_for_logits.1} parent=84 // pred_check_branch
              %205 = sbr.rel (%p202) target = $region100
            $region99: #{mlm_for_logits.1} parent=84 // pred_region
              %s206 = sand.u32 1, 7
              %s207 = ssub.s32 1, %s206
              %s208 = scalar_lea.vmem %s178, %s207
              %s209 = ssub.s32 1, %s206
              %s210 = scalar_lea.vmem %s179, %s209 [#allocation3]
              %s211 = sshll.u32 1, %s206
              %s212 = ssub.s32 %s211, 1
              loop: start=0, step=1, limit=1
              $region101: #{mlm_for_logits.1} parent=99 // loop_pre_header
                _
              $region102: #{mlm_for_logits.1} parent=99 // loop_header
                %s214 = sphi 0, %s218
                %p215 = scmp.ge.s32.totalorder %s214, 1
                %s219 = sphi %s208, %s208
                %s220 = sphi %s210, %s210
              $region103: #{mlm_for_logits.1} parent=99 // loop_header_branch
                %217 = sbr.rel (%p215) target = $region107
              $region104: #{mlm_for_logits.1} parent=99 // loop_body
                %v221 = vld [vmem:[%s219] sm:%s212]
                %222 = vst [vmem:[%s220] sm:%s212] %v221
              $region105: #{mlm_for_logits.1} parent=99 // loop_footer
                %s218 = sadd.s32 1, %s214
              $region106: #{mlm_for_logits.1} parent=99 // loop_footer_branch
                %213 = sbr.rel target = $region102
              $region107: #{mlm_for_logits.1} parent=99 // loop_exit
                _
            $region100: #{mlm_for_logits.1} parent=84 // pred_fallthru
              _
          $region85: #{mlm_for_logits.1} parent=80 // pred_fallthru
            _
          // Predicated region
          $region86: #{mlm_for_logits.1} parent=80 // pred_check
            %p186 = pneg %p182
          $region87: #{mlm_for_logits.1} parent=80 // pred_check_branch
            %188 = sbr.rel (%p186) target = $region89
          $region88: #{mlm_for_logits.1} parent=80 // pred_region
            %s189 = sshll.u32 1, 1
            %s190 = ssub.s32 %s189, 1
            loop: start=0, step=1, limit=1
            $region90: #{mlm_for_logits.1} parent=88 // loop_pre_header
              _
            $region91: #{mlm_for_logits.1} parent=88 // loop_header
              %s192 = sphi 0, %s196
              %p193 = scmp.ge.s32.totalorder %s192, 1
              %s197 = sphi %s178, %s178
              %s198 = sphi %s179, %s179
            $region92: #{mlm_for_logits.1} parent=88 // loop_header_branch
              %195 = sbr.rel (%p193) target = $region96
            $region93: #{mlm_for_logits.1} parent=88 // loop_body
              %v199 = vld [vmem:[%s197] sm:%s190]
              %200 = vst [vmem:[%s198] sm:%s190] %v199
            $region94: #{mlm_for_logits.1} parent=88 // loop_footer
              %s196 = sadd.s32 1, %s192
            $region95: #{mlm_for_logits.1} parent=88 // loop_footer_branch
              %191 = sbr.rel target = $region91
            $region96: #{mlm_for_logits.1} parent=88 // loop_exit
              _
          $region89: #{mlm_for_logits.1} parent=80 // pred_fallthru
            _
          // Predicated region
          $region108: #{mlm_for_logits.1} parent=80 // pred_check
            _
          $region109: #{mlm_for_logits.1} parent=80 // pred_check_branch
            %225 = sbr.rel (0) target = $region111
          $region110: #{mlm_for_logits.1} parent=80 // pred_region
            %226 = vsyncadd %s180, 16
          $region111: #{mlm_for_logits.1} parent=80 // pred_fallthru
            _
        $region81: #{mlm_for_logits.1} parent=74 // pred_fallthru
          _
        %s227 = scalar_lea.vmem [#allocation3], %s161
        %s228 = scalar_lea.sflag [#allocation4], %s161
        %s229 = smul.u32 1, 1
        %s230 = sshll.u32 %s229, 4
        %231 = dma.done %s228, %s230
        %p232 = scmp.lt.s32.totalorder %s144, 16
        %s233 = scalar_select %p232, 0.0625, 1.0
        %v234 = vld [vmem:[%s227] sm:$0x1]
        %v235 = vstv %s233
        %v236 = vmul.f32 %v235, %v234
        %v237 = vadd.f32 %v149, %v236
      $region75: #{mlm_for_logits.1} parent=37 // loop_footer
        %s148 = sadd.s32 1, %s144
      $region76: #{mlm_for_logits.1} parent=37 // loop_footer_branch
        %143 = sbr.rel target = $region72
      $region77: #{mlm_for_logits.1} parent=37 // loop_exit
        _
      %s238 = scalar_lea.vmem [#allocation2], %s86
      %239 = vst [vmem:[%s238] sm:$0x1] %v149
    $region38: #{mlm_for_logits.1} parent=1 // loop_footer
      %s90 = sadd.s32 1, %s86
    $region39: #{mlm_for_logits.1} parent=1 // loop_footer_branch
      %85 = sbr.rel target = $region35
    $region40: #{mlm_for_logits.1} parent=1 // loop_exit
      _
    loop: start=0, step=1, limit=8
    $region112: #{mlm_for_logits.1} parent=1 // loop_pre_header
      _
    $region113: #{mlm_for_logits.1} parent=1 // loop_header
      %s241 = sphi 0, %s245
      %p242 = scmp.ge.s32.totalorder %s241, 8
    $region114: #{mlm_for_logits.1} parent=1 // loop_header_branch
      %244 = sbr.rel (%p242) target = $region118
    $region115: #{mlm_for_logits.1} parent=1 // loop_body
      %s246 = smul.u32 0, 8
      %s247 = sadd.s32 %s246, %s241
      %s248 = sld [smem:[#allocation9 + %s247]]
      %s249 = smul.u32 %s247, 128
      %s250 = sld [smem:[#allocation8 + %s249]]
      %s251 = scalar_lea.vmem %s4, %s250
      %p253 = scmp.lt.u32.totalorder 1, 8
      %p254 = pneg %p253
      // Predicated region
      $region119: #{mlm_for_logits.1} parent=115 // pred_check
        _
      $region120: #{mlm_for_logits.1} parent=115 // pred_check_branch
        %256 = sbr.rel (%p253) target = $region122
      $region121: #{mlm_for_logits.1} parent=115 // pred_region
        %s272 = sand.u32 1, 7
        %p273 = scmp.eq.s32.totalorder %s272, 0
        %p274 = pneg %p273
        // Predicated region
        $region134: #{mlm_for_logits.1} parent=121 // pred_check
          _
        $region135: #{mlm_for_logits.1} parent=121 // pred_check_branch
          %276 = sbr.rel (%p273) target = $region137
        $region136: #{mlm_for_logits.1} parent=121 // pred_region
          %s277 = sand.u32 1, 7
          %s278 = ssub.s32 1, %s277
          %s279 = scalar_lea.vmem %s251, %s278
          %s280 = ssub.s32 1, %s277
          %s281 = scalar_lea.vmem [#allocation3], %s280
          %s282 = sshll.u32 1, %s277
          %s283 = ssub.s32 %s282, 1
          loop: start=0, step=1, limit=1
          $region138: #{mlm_for_logits.1} parent=136 // loop_pre_header
            _
          $region139: #{mlm_for_logits.1} parent=136 // loop_header
            %s285 = sphi 0, %s289
            %p286 = scmp.ge.s32.totalorder %s285, 1
            %s290 = sphi %s279, %s279
            %s291 = sphi %s281, %s281
          $region140: #{mlm_for_logits.1} parent=136 // loop_header_branch
            %288 = sbr.rel (%p286) target = $region144
          $region141: #{mlm_for_logits.1} parent=136 // loop_body
            %v292 = vld [vmem:[%s290] sm:%s283]
            %293 = vst [vmem:[%s291] sm:%s283] %v292
          $region142: #{mlm_for_logits.1} parent=136 // loop_footer
            %s289 = sadd.s32 1, %s285
          $region143: #{mlm_for_logits.1} parent=136 // loop_footer_branch
            %284 = sbr.rel target = $region139
          $region144: #{mlm_for_logits.1} parent=136 // loop_exit
            _
        $region137: #{mlm_for_logits.1} parent=121 // pred_fallthru
          _
      $region122: #{mlm_for_logits.1} parent=115 // pred_fallthru
        _
      // Predicated region
      $region123: #{mlm_for_logits.1} parent=115 // pred_check
        %p257 = pneg %p253
      $region124: #{mlm_for_logits.1} parent=115 // pred_check_branch
        %259 = sbr.rel (%p257) target = $region126
      $region125: #{mlm_for_logits.1} parent=115 // pred_region
        %s260 = sshll.u32 1, 1
        %s261 = ssub.s32 %s260, 1
        loop: start=0, step=1, limit=1
        $region127: #{mlm_for_logits.1} parent=125 // loop_pre_header
          _
        $region128: #{mlm_for_logits.1} parent=125 // loop_header
          %s263 = sphi 0, %s267
          %p264 = scmp.ge.s32.totalorder %s263, 1
          %s268 = sphi %s251, %s251
          %s269 = sphi [#allocation3], [#allocation3]
        $region129: #{mlm_for_logits.1} parent=125 // loop_header_branch
          %266 = sbr.rel (%p264) target = $region133
        $region130: #{mlm_for_logits.1} parent=125 // loop_body
          %v270 = vld [vmem:[%s268] sm:%s261]
          %271 = vst [vmem:[%s269] sm:%s261] %v270
        $region131: #{mlm_for_logits.1} parent=125 // loop_footer
          %s267 = sadd.s32 1, %s263
        $region132: #{mlm_for_logits.1} parent=125 // loop_footer_branch
          %262 = sbr.rel target = $region128
        $region133: #{mlm_for_logits.1} parent=125 // loop_exit
          _
      $region126: #{mlm_for_logits.1} parent=115 // pred_fallthru
        _
      // Predicated region
      $region145: #{mlm_for_logits.1} parent=115 // pred_check
        _
      $region146: #{mlm_for_logits.1} parent=115 // pred_check_branch
        %296 = sbr.rel (0) target = $region148
      $region147: #{mlm_for_logits.1} parent=115 // pred_region
        %297 = vsyncadd [#allocation4], 16
      $region148: #{mlm_for_logits.1} parent=115 // pred_fallthru
        _
      loop: start=0, step=1, limit=17
      $region149: #{mlm_for_logits.1} parent=115 // loop_pre_header
        _
      $region150: #{mlm_for_logits.1} parent=115 // loop_header
        %s299 = sphi 0, %s303
        %p300 = scmp.ge.s32.totalorder %s299, 17
        %v304 = vphi 0.0, %v392
      $region151: #{mlm_for_logits.1} parent=115 // loop_header_branch
        %302 = sbr.rel (%p300) target = $region155
      $region152: #{mlm_for_logits.1} parent=115 // loop_body
        %p305 = scmp.lt.s32.totalorder %s299, 0
        %s306 = ssub.s32 0, %s299
        %s307 = scalar_select %p305, %s306, %s299
        %s308 = sand.u32 %s307, 1
        %s309 = ssub.s32 0, %s308
        %s310 = scalar_select %p305, %s309, %s308
        %p311 = scmp.ne.s32.totalorder %s310, 0
        %p312 = scmp.lt.s32.totalorder %s310, 0
        %p313 = pnand %p312, %p311
        %p314 = pneg %p313
        %s315 = sadd.s32 %s310, 2
        %s316 = scalar_select %p314, %s315, %s310
        %s317 = sadd.s32 %s299, 1
        %p318 = scmp.le.s32.totalorder %s317, 16
        // Predicated region
        $region156: #{mlm_for_logits.1} parent=152 // pred_check
          %p319 = pneg %p318
        $region157: #{mlm_for_logits.1} parent=152 // pred_check_branch
          %321 = sbr.rel (%p319) target = $region159
        $region158: #{mlm_for_logits.1} parent=152 // pred_region
          %p322 = scmp.lt.s32.totalorder %s317, 16
          %s323 = scalar_select %p322, %s317, %s248
          %s324 = sshra.s32 %s323, 7
          %s325 = sand.u32 %s323, 127
          %s326 = sadd.s32 %s324, %s247
          %s327 = smul.u32 %s326, 128
          %s328 = sshra.s32 %s323, 7
          %s329 = sand.u32 %s323, 127
          %s330 = sadd.s32 %s327, %s329
          %s331 = sld [smem:[#allocation8 + %s330]]
          %s332 = ssub.s32 1, %s316
          %s333 = scalar_lea.vmem %s4, %s331
          %s334 = scalar_lea.vmem [#allocation3], %s332
          %s335 = scalar_lea.sflag [#allocation4], %s332
          %p337 = scmp.lt.u32.totalorder 1, 8
          %p338 = pneg %p337
          // Predicated region
          $region160: #{mlm_for_logits.1} parent=158 // pred_check
            _
          $region161: #{mlm_for_logits.1} parent=158 // pred_check_branch
            %340 = sbr.rel (%p337) target = $region163
          $region162: #{mlm_for_logits.1} parent=158 // pred_region
            %s356 = sand.u32 1, 7
            %p357 = scmp.eq.s32.totalorder %s356, 0
            %p358 = pneg %p357
            // Predicated region
            $region175: #{mlm_for_logits.1} parent=162 // pred_check
              _
            $region176: #{mlm_for_logits.1} parent=162 // pred_check_branch
              %360 = sbr.rel (%p357) target = $region178
            $region177: #{mlm_for_logits.1} parent=162 // pred_region
              %s361 = sand.u32 1, 7
              %s362 = ssub.s32 1, %s361
              %s363 = scalar_lea.vmem %s333, %s362
              %s364 = ssub.s32 1, %s361
              %s365 = scalar_lea.vmem %s334, %s364 [#allocation3]
              %s366 = sshll.u32 1, %s361
              %s367 = ssub.s32 %s366, 1
              loop: start=0, step=1, limit=1
              $region179: #{mlm_for_logits.1} parent=177 // loop_pre_header
                _
              $region180: #{mlm_for_logits.1} parent=177 // loop_header
                %s369 = sphi 0, %s373
                %p370 = scmp.ge.s32.totalorder %s369, 1
                %s374 = sphi %s363, %s363
                %s375 = sphi %s365, %s365
              $region181: #{mlm_for_logits.1} parent=177 // loop_header_branch
                %372 = sbr.rel (%p370) target = $region185
              $region182: #{mlm_for_logits.1} parent=177 // loop_body
                %v376 = vld [vmem:[%s374] sm:%s367]
                %377 = vst [vmem:[%s375] sm:%s367] %v376
              $region183: #{mlm_for_logits.1} parent=177 // loop_footer
                %s373 = sadd.s32 1, %s369
              $region184: #{mlm_for_logits.1} parent=177 // loop_footer_branch
                %368 = sbr.rel target = $region180
              $region185: #{mlm_for_logits.1} parent=177 // loop_exit
                _
            $region178: #{mlm_for_logits.1} parent=162 // pred_fallthru
              _
          $region163: #{mlm_for_logits.1} parent=158 // pred_fallthru
            _
          // Predicated region
          $region164: #{mlm_for_logits.1} parent=158 // pred_check
            %p341 = pneg %p337
          $region165: #{mlm_for_logits.1} parent=158 // pred_check_branch
            %343 = sbr.rel (%p341) target = $region167
          $region166: #{mlm_for_logits.1} parent=158 // pred_region
            %s344 = sshll.u32 1, 1
            %s345 = ssub.s32 %s344, 1
            loop: start=0, step=1, limit=1
            $region168: #{mlm_for_logits.1} parent=166 // loop_pre_header
              _
            $region169: #{mlm_for_logits.1} parent=166 // loop_header
              %s347 = sphi 0, %s351
              %p348 = scmp.ge.s32.totalorder %s347, 1
              %s352 = sphi %s333, %s333
              %s353 = sphi %s334, %s334
            $region170: #{mlm_for_logits.1} parent=166 // loop_header_branch
              %350 = sbr.rel (%p348) target = $region174
            $region171: #{mlm_for_logits.1} parent=166 // loop_body
              %v354 = vld [vmem:[%s352] sm:%s345]
              %355 = vst [vmem:[%s353] sm:%s345] %v354
            $region172: #{mlm_for_logits.1} parent=166 // loop_footer
              %s351 = sadd.s32 1, %s347
            $region173: #{mlm_for_logits.1} parent=166 // loop_footer_branch
              %346 = sbr.rel target = $region169
            $region174: #{mlm_for_logits.1} parent=166 // loop_exit
              _
          $region167: #{mlm_for_logits.1} parent=158 // pred_fallthru
            _
          // Predicated region
          $region186: #{mlm_for_logits.1} parent=158 // pred_check
            _
          $region187: #{mlm_for_logits.1} parent=158 // pred_check_branch
            %380 = sbr.rel (0) target = $region189
          $region188: #{mlm_for_logits.1} parent=158 // pred_region
            %381 = vsyncadd %s335, 16
          $region189: #{mlm_for_logits.1} parent=158 // pred_fallthru
            _
        $region159: #{mlm_for_logits.1} parent=152 // pred_fallthru
          _
        %s382 = scalar_lea.vmem [#allocation3], %s316
        %s383 = scalar_lea.sflag [#allocation4], %s316
        %s384 = smul.u32 1, 1
        %s385 = sshll.u32 %s384, 4
        %386 = dma.done %s383, %s385
        %p387 = scmp.lt.s32.totalorder %s299, 16
        %s388 = scalar_select %p387, 0.0625, 1.0
        %v389 = vld [vmem:[%s382] sm:$0x1]
        %v390 = vstv %s388
        %v391 = vmul.f32 %v390, %v389
        %v392 = vadd.f32 %v304, %v391
      $region153: #{mlm_for_logits.1} parent=115 // loop_footer
        %s303 = sadd.s32 1, %s299
      $region154: #{mlm_for_logits.1} parent=115 // loop_footer_branch
        %298 = sbr.rel target = $region150
      $region155: #{mlm_for_logits.1} parent=115 // loop_exit
        _
      %s393 = sadd.s32 %s241, 8
      %s394 = scalar_lea.vmem [#allocation2], %s393
      %395 = vst [vmem:[%s394] sm:$0x1] %v304
    $region116: #{mlm_for_logits.1} parent=1 // loop_footer
      %s245 = sadd.s32 1, %s241
    $region117: #{mlm_for_logits.1} parent=1 // loop_footer_branch
      %240 = sbr.rel target = $region113
    $region118: #{mlm_for_logits.1} parent=1 // loop_exit
      _
    %v396 = vld [vmem:[#allocation2] sm:$0xff]
    %v397 = vld [vmem:[#allocation2 + $0x8] sm:$0xff]
    %v398 = vpack.c.bf16 %v397, %v396
    %v399 = vld [vmem:[#allocation10] sm:$0xf]
    %v400 = vld [vmem:[#allocation10 + $0x4] sm:$0xf]
    %v401 = vld [vmem:[#allocation10 + $0x8] sm:$0xf]
    %v402 = vld [vmem:[#allocation10 + $0xc] sm:$0xf]
    %v403 = vld [vmem:[#allocation10 + $0x10] sm:$0xf]
    %v404 = vld [vmem:[#allocation10 + $0x14] sm:$0xf]
    %v405 = vld [vmem:[#allocation10 + $0x18] sm:$0xf]
    %v406 = vld [vmem:[#allocation10 + $0x1c] sm:$0xf]
    %v407 = vld [vmem:[#allocation10 + $0x20] sm:$0xf]
    %v408 = vld [vmem:[#allocation10 + $0x24] sm:$0xf]
    %v409 = vld [vmem:[#allocation10 + $0x28] sm:$0xf]
    %v410 = vld [vmem:[#allocation10 + $0x2c] sm:$0xf]
    %v411 = vld [vmem:[#allocation10 + $0x30] sm:$0xf]
    %v412 = vld [vmem:[#allocation10 + $0x34] sm:$0xf]
    %v413 = vld [vmem:[#allocation10 + $0x38] sm:$0xf]
    %v414 = vld [vmem:[#allocation10 + $0x3c] sm:$0xf]
    %v415 = vld [vmem:[%s6] sm:$0x1]
    %v417 = vlaneseq
    %v418 = vshrl.u32 %v417, 7
    %v419 = vsub.s32 0, %v418
    %v420 = vrot.slane %v415, %v419
    %v438 = vunpack.c.l.b16 %v399
    %v439 = vunpack.c.l.b16 %v400
    %v440 = vunpack.c.l.b16 %v401
    %v441 = vunpack.c.l.b16 %v402
    %v442 = vunpack.c.l.b16 %v403
    %v443 = vunpack.c.l.b16 %v404
    %v444 = vunpack.c.l.b16 %v405
    %v445 = vunpack.c.l.b16 %v406
    %v446 = vunpack.c.l.b16 %v407
    %v447 = vunpack.c.l.b16 %v408
    %v448 = vunpack.c.l.b16 %v409
    %v449 = vunpack.c.l.b16 %v410
    %v450 = vunpack.c.l.b16 %v411
    %v451 = vunpack.c.l.b16 %v412
    %v452 = vunpack.c.l.b16 %v413
    %v453 = vunpack.c.l.b16 %v414
    %v454 = vpack.c.b16 %v439, %v438
    %v455 = vpack.c.b16 %v441, %v440
    %v456 = vpack.c.b16 %v443, %v442
    %v457 = vpack.c.b16 %v445, %v444
    %v458 = vpack.c.b16 %v447, %v446
    %v459 = vpack.c.b16 %v449, %v448
    %v460 = vpack.c.b16 %v451, %v450
    %v461 = vpack.c.b16 %v453, %v452
    %470 = vmatprep.subr.bf16.mxu0 0
    %471 = vmatpush1.bf16.msra.mxu0 %v461
    %472 = vmatprep.subr.bf16.mxu0 0
    %473 = vmatpush1.bf16.msra.mxu0 %v460
    %474 = vmatprep.subr.bf16.mxu0 0
    %475 = vmatpush1.bf16.msra.mxu0 %v459
    %476 = vmatprep.subr.bf16.mxu0 0
    %477 = vmatpush1.bf16.msra.mxu0 %v458
    %478 = vmatprep.subr.bf16.mxu0 0
    %479 = vmatpush1.bf16.msra.mxu0 %v457
    %480 = vmatprep.subr.bf16.mxu0 0
    %481 = vmatpush1.bf16.msra.mxu0 %v456
    %482 = vmatprep.subr.bf16.mxu0 0
    %483 = vmatpush1.bf16.msra.mxu0 %v455
    %484 = vmatprep.subr.bf16.mxu0 0
    %485 = vmatpush1.bf16.msra.mxu0 %v454
    %486 = vmatprep.subr.bf16.mxu0 0
    %487 = vmatpush2.bf16.msra.mxu0 0
    %488 = vmatprep.subr.bf16.mxu0 0
    %489 = vmatpush2.bf16.msra.mxu0 0
    %490 = vmatprep.subr.bf16.mxu0 0
    %491 = vmatpush2.bf16.msra.mxu0 0
    %492 = vmatprep.subr.bf16.mxu0 0
    %493 = vmatpush2.bf16.msra.mxu0 0
    %494 = vmatprep.subr.bf16.mxu0 0
    %495 = vmatpush2.bf16.msra.mxu0 0
    %496 = vmatprep.subr.bf16.mxu0 0
    %497 = vmatpush2.bf16.msra.mxu0 0
    %498 = vmatprep.subr.bf16.mxu0 0
    %499 = vmatpush2.bf16.msra.mxu0 0
    %500 = vmatprep.subr.bf16.mxu0 0
    %501 = vmatpush2.bf16.msra.mxu0 0
    %502 = vmatprep.mubr.bf16.mxu0 0
    %503 = vmatmul.mubr.bf16.gmra.mxu0 %v398
    %v504 = vpop.f32.mrf.mxu0
    %v505 = vadd.f32 %v420, %v504
    %v506 = vpop.f32.mrf.mxu0
    %v507 = vpop.f32.mrf.mxu0
    %v508 = vadd.f32 %v420, %v507
    %v509 = vpop.f32.mrf.mxu0
    %510 = vdwg.mxu0
    %v511 = vmul.f32 %v505, 0.5
    %v512 = vmul.f32 %v508, 0.5
    %v513 = vmul.f32 %v505, 0.044715
    %v514 = vmul.f32 %v508, 0.044715
    %v515 = vmul.f32 %v513, %v505
    %v516 = vmul.f32 %v514, %v508
    %v517 = vmul.f32 %v515, %v505
    %v518 = vmul.f32 %v516, %v508
    %v519 = vadd.f32 %v505, %v517
    %v520 = vadd.f32 %v508, %v518
    %v521 = vmul.f32 %v519, 0.7978846
    %v522 = vmul.f32 %v520, 0.7978846
    %v523 = vtanh.pop %v521
    %v524 = vtanh.pop %v522
    %v525 = vadd.f32 %v523, 1.0
    %v526 = vadd.f32 %v524, 1.0
    %v527 = vmul.f32 %v511, %v525
    %v528 = vmul.f32 %v512, %v526
    %v529 = vpack.c.bf16 %v527, %v527
    %v530 = vpack.c.bf16 %v528, %v528
    %v531 = vld [vmem:[#allocation12] sm:$0xf]
    %v532 = vld [vmem:[#allocation12 + $0x4] sm:$0xf]
    %v533 = vld [vmem:[#allocation12 + $0x8] sm:$0xf]
    %v534 = vld [vmem:[#allocation12 + $0xc] sm:$0xf]
    %v535 = vld [vmem:[#allocation12 + $0x10] sm:$0xf]
    %v536 = vld [vmem:[#allocation12 + $0x14] sm:$0xf]
    %v537 = vld [vmem:[#allocation12 + $0x18] sm:$0xf]
    %v538 = vld [vmem:[#allocation12 + $0x1c] sm:$0xf]
    %v539 = vld [vmem:[#allocation12 + $0x20] sm:$0xf]
    %v540 = vld [vmem:[#allocation12 + $0x24] sm:$0xf]
    %v541 = vld [vmem:[#allocation12 + $0x28] sm:$0xf]
    %v542 = vld [vmem:[#allocation12 + $0x2c] sm:$0xf]
    %v543 = vld [vmem:[#allocation12 + $0x30] sm:$0xf]
    %v544 = vld [vmem:[#allocation12 + $0x34] sm:$0xf]
    %v545 = vld [vmem:[#allocation12 + $0x38] sm:$0xf]
    %v546 = vld [vmem:[#allocation12 + $0x3c] sm:$0xf]
    %v547 = vld [vmem:[#allocation14] sm:$0xf]
    %v548 = vld [vmem:[#allocation14 + $0x4] sm:$0xf]
    %v549 = vld [vmem:[#allocation14 + $0x8] sm:$0xf]
    %v550 = vld [vmem:[#allocation14 + $0xc] sm:$0xf]
    %v551 = vld [vmem:[#allocation14 + $0x10] sm:$0xf]
    %v552 = vld [vmem:[#allocation14 + $0x14] sm:$0xf]
    %v553 = vld [vmem:[#allocation14 + $0x18] sm:$0xf]
    %v554 = vld [vmem:[#allocation14 + $0x1c] sm:$0xf]
    %v555 = vld [vmem:[#allocation14 + $0x20] sm:$0xf]
    %v556 = vld [vmem:[#allocation14 + $0x24] sm:$0xf]
    %v557 = vld [vmem:[#allocation14 + $0x28] sm:$0xf]
    %v558 = vld [vmem:[#allocation14 + $0x2c] sm:$0xf]
    %v559 = vld [vmem:[#allocation14 + $0x30] sm:$0xf]
    %v560 = vld [vmem:[#allocation14 + $0x34] sm:$0xf]
    %v561 = vld [vmem:[#allocation14 + $0x38] sm:$0xf]
    %v562 = vld [vmem:[#allocation14 + $0x3c] sm:$0xf]
    %v579 = vunpack.c.l.b16 %v547
    %v580 = vunpack.c.l.b16 %v548
    %v581 = vunpack.c.l.b16 %v549
    %v582 = vunpack.c.l.b16 %v550
    %v583 = vunpack.c.l.b16 %v551
    %v584 = vunpack.c.l.b16 %v552
    %v585 = vunpack.c.l.b16 %v553
    %v586 = vunpack.c.l.b16 %v554
    %v587 = vunpack.c.l.b16 %v555
    %v588 = vunpack.c.l.b16 %v556
    %v589 = vunpack.c.l.b16 %v557
    %v590 = vunpack.c.l.b16 %v558
    %v591 = vunpack.c.l.b16 %v559
    %v592 = vunpack.c.l.b16 %v560
    %v593 = vunpack.c.l.b16 %v561
    %v594 = vunpack.c.l.b16 %v562
    %v595 = vpack.c.b16 %v580, %v579
    %v596 = vpack.c.b16 %v582, %v581
    %v597 = vpack.c.b16 %v584, %v583
    %v598 = vpack.c.b16 %v586, %v585
    %v599 = vpack.c.b16 %v588, %v587
    %v600 = vpack.c.b16 %v590, %v589
    %v601 = vpack.c.b16 %v592, %v591
    %v602 = vpack.c.b16 %v594, %v593
    %611 = vmatprep.subr.bf16.mxu0 0
    %612 = vmatpush1.bf16.msra.mxu0 %v602
    %613 = vmatprep.subr.bf16.mxu0 0
    %614 = vmatpush1.bf16.msra.mxu0 %v601
    %615 = vmatprep.subr.bf16.mxu0 0
    %616 = vmatpush1.bf16.msra.mxu0 %v600
    %617 = vmatprep.subr.bf16.mxu0 0
    %618 = vmatpush1.bf16.msra.mxu0 %v599
    %619 = vmatprep.subr.bf16.mxu0 0
    %620 = vmatpush1.bf16.msra.mxu0 %v598
    %621 = vmatprep.subr.bf16.mxu0 0
    %622 = vmatpush1.bf16.msra.mxu0 %v597
    %623 = vmatprep.subr.bf16.mxu0 0
    %624 = vmatpush1.bf16.msra.mxu0 %v596
    %625 = vmatprep.subr.bf16.mxu0 0
    %626 = vmatpush1.bf16.msra.mxu0 %v595
    %627 = vmatprep.subr.bf16.mxu0 0
    %628 = vmatpush2.bf16.msra.mxu0 0
    %629 = vmatprep.subr.bf16.mxu0 0
    %630 = vmatpush2.bf16.msra.mxu0 0
    %631 = vmatprep.subr.bf16.mxu0 0
    %632 = vmatpush2.bf16.msra.mxu0 0
    %633 = vmatprep.subr.bf16.mxu0 0
    %634 = vmatpush2.bf16.msra.mxu0 0
    %635 = vmatprep.subr.bf16.mxu0 0
    %636 = vmatpush2.bf16.msra.mxu0 0
    %637 = vmatprep.subr.bf16.mxu0 0
    %638 = vmatpush2.bf16.msra.mxu0 0
    %639 = vmatprep.subr.bf16.mxu0 0
    %640 = vmatpush2.bf16.msra.mxu0 0
    %641 = vmatprep.subr.bf16.mxu0 0
    %642 = vmatpush2.bf16.msra.mxu0 0
    %643 = vmatprep.mubr.bf16.mxu0 0
    %644 = vmatmul.mubr.bf16.gmra.mxu0 %v530
    %v645 = vpop.f32.mrf.mxu0
    %v646 = vadd.f32 0.0, %v645
    %v647 = vpop.f32.mrf.mxu0
    %v648 = vpop.f32.mrf.mxu0
    %v649 = vpop.f32.mrf.mxu0
    %650 = vdwg.mxu0
    %v667 = vunpack.c.l.b16 %v531
    %v668 = vunpack.c.l.b16 %v532
    %v669 = vunpack.c.l.b16 %v533
    %v670 = vunpack.c.l.b16 %v534
    %v671 = vunpack.c.l.b16 %v535
    %v672 = vunpack.c.l.b16 %v536
    %v673 = vunpack.c.l.b16 %v537
    %v674 = vunpack.c.l.b16 %v538
    %v675 = vunpack.c.l.b16 %v539
    %v676 = vunpack.c.l.b16 %v540
    %v677 = vunpack.c.l.b16 %v541
    %v678 = vunpack.c.l.b16 %v542
    %v679 = vunpack.c.l.b16 %v543
    %v680 = vunpack.c.l.b16 %v544
    %v681 = vunpack.c.l.b16 %v545
    %v682 = vunpack.c.l.b16 %v546
    %v683 = vpack.c.b16 %v668, %v667
    %v684 = vpack.c.b16 %v670, %v669
    %v685 = vpack.c.b16 %v672, %v671
    %v686 = vpack.c.b16 %v674, %v673
    %v687 = vpack.c.b16 %v676, %v675
    %v688 = vpack.c.b16 %v678, %v677
    %v689 = vpack.c.b16 %v680, %v679
    %v690 = vpack.c.b16 %v682, %v681
    %699 = vmatprep.subr.bf16.mxu0 0
    %700 = vmatpush1.bf16.msra.mxu0 %v690
    %701 = vmatprep.subr.bf16.mxu0 0
    %702 = vmatpush1.bf16.msra.mxu0 %v689
    %703 = vmatprep.subr.bf16.mxu0 0
    %704 = vmatpush1.bf16.msra.mxu0 %v688
    %705 = vmatprep.subr.bf16.mxu0 0
    %706 = vmatpush1.bf16.msra.mxu0 %v687
    %707 = vmatprep.subr.bf16.mxu0 0
    %708 = vmatpush1.bf16.msra.mxu0 %v686
    %709 = vmatprep.subr.bf16.mxu0 0
    %710 = vmatpush1.bf16.msra.mxu0 %v685
    %711 = vmatprep.subr.bf16.mxu0 0
    %712 = vmatpush1.bf16.msra.mxu0 %v684
    %713 = vmatprep.subr.bf16.mxu0 0
    %714 = vmatpush1.bf16.msra.mxu0 %v683
    %715 = vmatprep.subr.bf16.mxu0 0
    %716 = vmatpush2.bf16.msra.mxu0 0
    %717 = vmatprep.subr.bf16.mxu0 0
    %718 = vmatpush2.bf16.msra.mxu0 0
    %719 = vmatprep.subr.bf16.mxu0 0
    %720 = vmatpush2.bf16.msra.mxu0 0
    %721 = vmatprep.subr.bf16.mxu0 0
    %722 = vmatpush2.bf16.msra.mxu0 0
    %723 = vmatprep.subr.bf16.mxu0 0
    %724 = vmatpush2.bf16.msra.mxu0 0
    %725 = vmatprep.subr.bf16.mxu0 0
    %726 = vmatpush2.bf16.msra.mxu0 0
    %727 = vmatprep.subr.bf16.mxu0 0
    %728 = vmatpush2.bf16.msra.mxu0 0
    %729 = vmatprep.subr.bf16.mxu0 0
    %730 = vmatpush2.bf16.msra.mxu0 0
    %731 = vmatprep.mubr.bf16.mxu0 0
    %732 = vmatmul.mubr.bf16.gmra.mxu0 %v529
    %v733 = vpop.f32.mrf.mxu0
    %v734 = vadd.f32 %v646, %v733
    %v735 = vpop.f32.mrf.mxu0
    %v736 = vpop.f32.mrf.mxu0
    %v737 = vpop.f32.mrf.mxu0
    %738 = vdwg.mxu0
    %v739 = vld [vmem:[%s9] sm:$0x1]
    %v741 = vlaneseq
    %v742 = vshrl.u32 %v741, 7
    %v743 = vsub.s32 0, %v742
    %v744 = vrot.slane %v739, %v743
    %v746 = vadd.f32 %v734, %v744
    %747 = vst [vmem:[%s10] sm:$0xff] %v746
    // Predicated region
    $region190: #{mlm_for_logits.1} parent=1 // pred_check
      _
    $region191: #{mlm_for_logits.1} parent=1 // pred_check_branch
      %749 = sbr.rel (0) target = $region193
    $region192: #{mlm_for_logits.1} parent=1 // pred_region
      _
    $region193: #{mlm_for_logits.1} parent=1 // pred_fallthru
      _
    // Predicated region
    $region194: #{mlm_for_logits.1} parent=1 // pred_check
      _
    $region195: #{mlm_for_logits.1} parent=1 // pred_check_branch
      %751 = sbr.rel (0) target = $region197
    $region196: #{mlm_for_logits.1} parent=1 // pred_region
      _
    $region197: #{mlm_for_logits.1} parent=1 // pred_fallthru
      _
    %752 = vsyncpa [#allocation11], 1
    %753 = vsyncpa [#allocation13], 1
  %754 = vsyncmov [#allocation4]
  %s755 = vpop.sfrf %754
  %p756 = scmp.eq.s32.totalorder %s755, 0
  %p757 = pneg %p756
  %759 = shalt.err (%p757)
  %s760 = scalar_lea.sflag [#allocation4], 1
  %761 = vsyncmov %s760
  %s762 = vpop.sfrf %761
  %p763 = scmp.eq.s32.totalorder %s762, 0
  %p764 = pneg %p763
  %766 = shalt.err (%p764)

</llo_original>
